<compile_context>
chip_gen: v6e
topology: v6e:2x2x1
jax: 0.10.0
libtpu: 0.0.40
codegen_flags: <defaults>
</compile_context>

<pallas_src>
import functools

import jax
import jax.numpy as jnp
from jax.experimental import pallas as pl
from jax.experimental.pallas import tpu as pltpu


def _afno_block_mlp_kernel(*refs, lam, apply_mask):
    """One (block, M-tile) step of the AFNO2D frequency-domain block MLP.

    Packed-complex layout: inputs/outputs stack [real; imag] along the
    sublane (row) axis, positions live in the lane axis.

      x    : (1, 2*bs,  TM)   packed spectrum tile
      w1   : (1, 2*bsf, 2*bs) fused layer-1 complex weight (transposed)
      b1   : (1, 2*bsf, 1)
      w2   : (1, 2*bs,  2*bsf)
      b2   : (1, 2*bs,  1)
      out  : (1, 2*bs,  TM)   packed softshrunk (and mode-masked) result
    """
    if apply_mask:
        mask_ref, x_ref, w1_ref, b1_ref, w2_ref, b2_ref, o_ref = refs
    else:
        x_ref, w1_ref, b1_ref, w2_ref, b2_ref, o_ref = refs
        mask_ref = None

    x = x_ref[0]                      # (2*bs, TM)
    w1 = w1_ref[0]                    # (2*bsf, 2*bs)
    w2 = w2_ref[0]                    # (2*bs, 2*bsf)
    b1 = b1_ref[0]                    # (2*bsf, 1) -> broadcasts over lanes
    b2 = b2_ref[0]                    # (2*bs, 1)

    # layer 1: single fused complex matmul + bias + ReLU
    o1 = jnp.dot(w1, x, preferred_element_type=jnp.float32) + b1   # (2*bsf, TM)
    o1 = jnp.maximum(o1, 0.0)

    # layer 2: single fused complex matmul + bias
    o2 = jnp.dot(w2, o1.astype(w2.dtype),
                 preferred_element_type=jnp.float32) + b2          # (2*bs, TM)

    # softshrink (must come before the kept-modes mask; softshrink(0)=0 so the
    # masked region ends up exactly zero, matching the PyTorch zero-init).
    o2 = jnp.where(o2 > lam, o2 - lam, jnp.where(o2 < -lam, o2 + lam, 0.0))

    if apply_mask:
        o2 = o2 * mask_ref[...]       # (1, TM) {0,1} mask, broadcasts over rows

    o_ref[0] = o2.astype(o_ref.dtype)


def afno2d_forward(x, w1, b1, w2, b2, *, num_blocks=8,
                   sparsity_threshold=0.01, hard_thresholding_fraction=1.0,
                   tm=1024, compute_dtype=jnp.float32):
    """AFNO2D forward. x: (B, H, W, C). Returns (B, H, W, C) in x.dtype."""
    orig_dtype = x.dtype
    bias = x
    xf32 = x.astype(jnp.float32)
    B, H, W, C = x.shape
    nb = num_blocks
    bs = C // nb
    bsf = w1.shape[-1]            # block_size * hidden_size_factor
    Wf = W // 2 + 1

    # TODO(synk): FFTs stay in XLA (no Pallas equivalent).
    xfreq = jnp.fft.rfft2(xf32, axes=(1, 2), norm="ortho")   # (B,H,Wf,C) c64

    M = B * H * Wf
    # Lane-dense tile along the flattened position axis; clamp for tiny inputs.
    m_round = ((M + 127) // 128) * 128
    tm_eff = max(128, min(((tm + 127) // 128) * 128, m_round))
    m_tiles = (M + tm_eff - 1) // tm_eff
    Mpad = m_tiles * tm_eff

    # ---- pack spectrum: (B,H,Wf,C) complex -> (nb, 2*bs, Mpad) real --------
    xc = xfreq.reshape(B, H, Wf, nb, bs)
    xc = jnp.transpose(xc, (3, 4, 0, 1, 2)).reshape(nb, bs, M)
    xpk = jnp.concatenate([jnp.real(xc), jnp.imag(xc)], axis=1)  # (nb, 2*bs, M)
    if Mpad != M:
        xpk = jnp.pad(xpk, ((0, 0), (0, 0), (0, Mpad - M)))
    xpk = xpk.astype(compute_dtype)

    # ---- fused complex weights / biases ------------------------------------
    w1r = jnp.transpose(w1[0], (0, 2, 1)).astype(jnp.float32)   # (nb, bsf, bs)
    w1i = jnp.transpose(w1[1], (0, 2, 1)).astype(jnp.float32)
    w1c = jnp.concatenate(
        [jnp.concatenate([w1r, -w1i], axis=2),
         jnp.concatenate([w1i, w1r], axis=2)], axis=1).astype(compute_dtype)  # (nb,2bsf,2bs)
    b1c = jnp.concatenate([b1[0], b1[1]], axis=1).reshape(nb, 2 * bsf, 1).astype(jnp.float32)

    w2r = jnp.transpose(w2[0], (0, 2, 1)).astype(jnp.float32)   # (nb, bs, bsf)
    w2i = jnp.transpose(w2[1], (0, 2, 1)).astype(jnp.float32)
    w2c = jnp.concatenate(
        [jnp.concatenate([w2r, -w2i], axis=2),
         jnp.concatenate([w2i, w2r], axis=2)], axis=1).astype(compute_dtype)  # (nb,2bs,2bsf)
    b2c = jnp.concatenate([b2[0], b2[1]], axis=1).reshape(nb, 2 * bs, 1).astype(jnp.float32)

    # ---- kept-modes region (static) -----------------------------------------
    total_modes = H // 2 + 1
    kept_modes = int(total_modes * hard_thresholding_fraction)
    row_lo = max(total_modes - kept_modes, 0)
    row_hi = min(total_modes + kept_modes, H)
    col_hi = min(kept_modes, Wf)
    full_keep = (row_lo == 0 and row_hi == H and col_hi == Wf)

    kernel = functools.partial(_afno_block_mlp_kernel,
                               lam=float(sparsity_threshold),
                               apply_mask=not full_keep)

    data_spec = pl.BlockSpec((1, 2 * bs, tm_eff), lambda k, m: (k, 0, m))
    w1_spec = pl.BlockSpec((1, 2 * bsf, 2 * bs), lambda k, m: (k, 0, 0))
    b1_spec = pl.BlockSpec((1, 2 * bsf, 1), lambda k, m: (k, 0, 0))
    w2_spec = pl.BlockSpec((1, 2 * bs, 2 * bsf), lambda k, m: (k, 0, 0))
    b2_spec = pl.BlockSpec((1, 2 * bs, 1), lambda k, m: (k, 0, 0))

    in_specs = []
    call_args = []
    if not full_keep:
        # Precomputed {0,1} mask over flat positions (replaces in-kernel div/mod).
        p = jnp.arange(Mpad)
        rem = p % (H * Wf)
        row = rem // Wf
        col = rem % Wf
        keep = (row >= row_lo) & (row < row_hi) & (col < col_hi) & (p < M)
        mask = keep.astype(jnp.float32).reshape(1, Mpad)
        in_specs.append(pl.BlockSpec((1, tm_eff), lambda k, m: (0, m)))
        call_args.append(mask)
    in_specs += [data_spec, w1_spec, b1_spec, w2_spec, b2_spec]
    call_args += [xpk, w1c, b1c, w2c, b2c]

    itemsize = jnp.dtype(compute_dtype).itemsize
    flops = 16 * nb * bs * bsf * Mpad                         # 2 fused complex matmuls
    bytes_accessed = (2 * nb * (2 * bs) * Mpad * itemsize      # packed in + out
                      + 2 * nb * (2 * bsf) * (2 * bs) * itemsize)

    out = pl.pallas_call(
        kernel,
        grid=(nb, m_tiles),
        in_specs=in_specs,
        out_specs=data_spec,
        out_shape=jax.ShapeDtypeStruct((nb, 2 * bs, Mpad), jnp.float32),
        compiler_params=pltpu.CompilerParams(
            dimension_semantics=("parallel", "parallel"),
            # 48 MiB: safe on v7x (64 MiB VMEM) as well as v5e/v6e (128 MiB).
            vmem_limit_bytes=48 * 1024 * 1024),
        cost_estimate=pl.CostEstimate(flops=flops, transcendentals=0,
                                      bytes_accessed=bytes_accessed),
    )(*call_args)

    # ---- unpack: (nb, 2*bs, Mpad) -> (B, H, Wf, C) complex ------------------
    out = out[:, :, :M]                         # drop padded tail (garbage there)
    o_r = out[:, :bs].reshape(nb, bs, B, H, Wf)
    o_i = out[:, bs:].reshape(nb, bs, B, H, Wf)
    yc = jax.lax.complex(o_r, o_i)
    yc = jnp.transpose(yc, (2, 3, 4, 0, 1)).reshape(B, H, Wf, C)

    y = jnp.fft.irfft2(yc, s=(H, W), axes=(1, 2), norm="ortho")
    return y.astype(orig_dtype) + bias


def _reference_afno2d(x, w1, b1, w2, b2, *, num_blocks=8,
                      sparsity_threshold=0.01, hard_thresholding_fraction=1.0):
    """Pure-JAX transcription of the PyTorch forward, for correctness check."""
    dtype = x.dtype
    bias = x
    xf = x.astype(jnp.float32)
    B, H, W, C = x.shape
    nb = num_blocks
    bs = C // nb
    Wf = W // 2 + 1

    xc = jnp.fft.rfft2(xf, axes=(1, 2), norm="ortho").reshape(B, H, Wf, nb, bs)

    total_modes = H // 2 + 1
    kept = int(total_modes * hard_thresholding_fraction)
    rlo, rhi, chi = total_modes - kept, total_modes + kept, kept

    xs = xc[:, rlo:rhi, :chi]
    xrs, xis = jnp.real(xs), jnp.imag(xs)

    ein = functools.partial(jnp.einsum, precision=jax.lax.Precision.HIGHEST)
    o1r = jax.nn.relu(ein('...bi,bio->...bo', xrs, w1[0])
                      - ein('...bi,bio->...bo', xis, w1[1]) + b1[0])
    o1i = jax.nn.relu(ein('...bi,bio->...bo', xis, w1[0])
                      + ein('...bi,bio->...bo', xrs, w1[1]) + b1[1])
    o2r_s = (ein('...bi,bio->...bo', o1r, w2[0])
             - ein('...bi,bio->...bo', o1i, w2[1]) + b2[0])
    o2i_s = (ein('...bi,bio->...bo', o1i, w2[0])
             + ein('...bi,bio->...bo', o1r, w2[1]) + b2[1])

    o2r = jnp.zeros((B, H, Wf, nb, bs), jnp.float32).at[:, rlo:rhi, :chi].set(o2r_s)
    o2i = jnp.zeros((B, H, Wf, nb, bs), jnp.float32).at[:, rlo:rhi, :chi].set(o2i_s)

    lam = sparsity_threshold

    def softshrink(v):
        return jnp.where(v > lam, v - lam, jnp.where(v < -lam, v + lam, 0.0))

    yc = (softshrink(o2r) + 1j * softshrink(o2i)).reshape(B, H, Wf, C)
    y = jnp.fft.irfft2(yc, s=(H, W), axes=(1, 2), norm="ortho")
    return y.astype(dtype) + bias


if __name__ == "__main__":
    # Small config consistent with AFNO2D: hidden_size divisible by num_blocks.
    B, H, W = 2, 16, 16
    hidden_size = 64
    num_blocks = 8
    hidden_size_factor = 1
    bs = hidden_size // num_blocks
    bsf = bs * hidden_size_factor

    key = jax.random.PRNGKey(0)
    kx, k1, k2, k3, k4 = jax.random.split(key, 5)
    scale = 0.02

    x = jax.random.normal(kx, (B, H, W, hidden_size), dtype=jnp.float32)
    w1 = scale * jax.random.normal(k1, (2, num_blocks, bs, bsf), dtype=jnp.float32)
    b1 = scale * jax.random.normal(k2, (2, num_blocks, bsf), dtype=jnp.float32)
    w2 = scale * jax.random.normal(k3, (2, num_blocks, bsf, bs), dtype=jnp.float32)
    b2 = scale * jax.random.normal(k4, (2, num_blocks, bs), dtype=jnp.float32)

    # Full-keep path (hard_thresholding_fraction = 1.0, the module default).
    out = afno2d_forward(x, w1, b1, w2, b2, num_blocks=num_blocks)
    out = jax.block_until_ready(out)
    ref = _reference_afno2d(x, w1, b1, w2, b2, num_blocks=num_blocks)
    ref = jax.block_until_ready(ref)
    assert out.shape == (B, H, W, hidden_size), out.shape
    assert jnp.allclose(out, ref, atol=1e-4, rtol=1e-4), \
        float(jnp.max(jnp.abs(out - ref)))

    # Masked path (hard_thresholding_fraction < 1) exercises the precomputed mask.
    out2 = afno2d_forward(x, w1, b1, w2, b2, num_blocks=num_blocks,
                          hard_thresholding_fraction=0.5)
    out2 = jax.block_until_ready(out2)
    ref2 = _reference_afno2d(x, w1, b1, w2, b2, num_blocks=num_blocks,
                             hard_thresholding_fraction=0.5)
    ref2 = jax.block_until_ready(ref2)
    assert jnp.allclose(out2, ref2, atol=1e-4, rtol=1e-4), \
        float(jnp.max(jnp.abs(out2 - ref2)))

    print("KERNEL_OK")
</pallas_src>

<mosaic_0001>
module attributes {stable_mosaic.version = 11 : i64} {
  func.func @_afno_block_mlp_kernel(%arg0: i32, %arg1: i32, %arg2: memref<1x16x384xf32, #tpu.memory_space<vmem>>, %arg3: memref<1x16x16xf32, #tpu.memory_space<vmem>>, %arg4: memref<1x16x1xf32, #tpu.memory_space<vmem>>, %arg5: memref<1x16x16xf32, #tpu.memory_space<vmem>>, %arg6: memref<1x16x1xf32, #tpu.memory_space<vmem>>, %arg7: memref<1x16x384xf32, #tpu.memory_space<vmem>>) attributes {dimension_semantics = [#tpu.dimension_semantics<parallel>, #tpu.dimension_semantics<parallel>], iteration_bounds = array<i64: 8, 1>, scalar_prefetch = 0 : i64, scratch_operands = 0 : i64, tpu.core_type = #tpu.core_type<tc>, window_params = [{transform_indices = @transform_0, window_bounds = array<i64: 1, 16, 384>}, {transform_indices = @transform_1, window_bounds = array<i64: 1, 16, 16>}, {transform_indices = @transform_2, window_bounds = array<i64: 1, 16, 1>}, {transform_indices = @transform_3, window_bounds = array<i64: 1, 16, 16>}, {transform_indices = @transform_4, window_bounds = array<i64: 1, 16, 1>}, {transform_indices = @transform_5, window_bounds = array<i64: 1, 16, 384>}]} {
    %c0 = arith.constant 0 : index
    %c0_0 = arith.constant 0 : index
    %c0_1 = arith.constant 0 : index
    %0 = vector.load %arg2[%c0, %c0_0, %c0_1] : memref<1x16x384xf32, #tpu.memory_space<vmem>>, vector<1x16x384xf32>
    %1 = vector.shape_cast %0 : vector<1x16x384xf32> to vector<16x384xf32>
    %c0_2 = arith.constant 0 : index
    %c0_3 = arith.constant 0 : index
    %c0_4 = arith.constant 0 : index
    %2 = vector.load %arg3[%c0_2, %c0_3, %c0_4] : memref<1x16x16xf32, #tpu.memory_space<vmem>>, vector<1x16x16xf32>
    %3 = vector.shape_cast %2 : vector<1x16x16xf32> to vector<16x16xf32>
    %c0_5 = arith.constant 0 : index
    %c0_6 = arith.constant 0 : index
    %c0_7 = arith.constant 0 : index
    %4 = vector.load %arg5[%c0_5, %c0_6, %c0_7] : memref<1x16x16xf32, #tpu.memory_space<vmem>>, vector<1x16x16xf32>
    %5 = vector.shape_cast %4 : vector<1x16x16xf32> to vector<16x16xf32>
    %c0_8 = arith.constant 0 : index
    %c0_9 = arith.constant 0 : index
    %c0_10 = arith.constant 0 : index
    %6 = vector.load %arg4[%c0_8, %c0_9, %c0_10] : memref<1x16x1xf32, #tpu.memory_space<vmem>>, vector<1x16x1xf32>
    %7 = vector.shape_cast %6 : vector<1x16x1xf32> to vector<16x1xf32>
    %c0_11 = arith.constant 0 : index
    %c0_12 = arith.constant 0 : index
    %c0_13 = arith.constant 0 : index
    %8 = vector.load %arg6[%c0_11, %c0_12, %c0_13] : memref<1x16x1xf32, #tpu.memory_space<vmem>>, vector<1x16x1xf32>
    %9 = vector.shape_cast %8 : vector<1x16x1xf32> to vector<16x1xf32>
    %cst = arith.constant dense<0.000000e+00> : vector<16x384xf32>
    %10 = tpu.matmul %3, %1, %cst {dimension_numbers = #tpu.dot_dimension_numbers<[1], [0], [0], [1], [0, 0, 1, 1], [], []>} : vector<16x16xf32>, vector<16x384xf32>, vector<16x384xf32> -> vector<16x384xf32>
    %11 = vector.broadcast %7 : vector<16x1xf32> to vector<16x384xf32>
    %12 = arith.addf %10, %11 : vector<16x384xf32>
    %cst_14 = arith.constant 0.000000e+00 : f32
    %13 = vector.broadcast %cst_14 : f32 to vector<16x384xf32>
    %14 = arith.maximumf %12, %13 : vector<16x384xf32>
    %cst_15 = arith.constant dense<0.000000e+00> : vector<16x384xf32>
    %15 = tpu.matmul %5, %14, %cst_15 {dimension_numbers = #tpu.dot_dimension_numbers<[1], [0], [0], [1], [0, 0, 1, 1], [], []>} : vector<16x16xf32>, vector<16x384xf32>, vector<16x384xf32> -> vector<16x384xf32>
    %16 = vector.broadcast %9 : vector<16x1xf32> to vector<16x384xf32>
    %17 = arith.addf %15, %16 : vector<16x384xf32>
    %cst_16 = arith.constant 0.00999999977 : f32
    %18 = vector.broadcast %cst_16 : f32 to vector<16x384xf32>
    %19 = arith.cmpf ogt, %17, %18 : vector<16x384xf32>
    %cst_17 = arith.constant 0.00999999977 : f32
    %20 = vector.broadcast %cst_17 : f32 to vector<16x384xf32>
    %21 = arith.subf %17, %20 : vector<16x384xf32>
    %cst_18 = arith.constant -0.00999999977 : f32
    %22 = vector.broadcast %cst_18 : f32 to vector<16x384xf32>
    %23 = arith.cmpf olt, %17, %22 : vector<16x384xf32>
    %cst_19 = arith.constant 0.00999999977 : f32
    %24 = vector.broadcast %cst_19 : f32 to vector<16x384xf32>
    %25 = arith.addf %17, %24 : vector<16x384xf32>
    %cst_20 = arith.constant 0.000000e+00 : f32
    %26 = vector.broadcast %cst_20 : f32 to vector<16x384xf32>
    %27 = arith.select %23, %25, %26 : vector<16x384xi1>, vector<16x384xf32>
    %28 = arith.select %19, %21, %27 : vector<16x384xi1>, vector<16x384xf32>
    %c0_21 = arith.constant 0 : index
    %c0_22 = arith.constant 0 : index
    %c0_23 = arith.constant 0 : index
    %29 = vector.load %arg7[%c0_21, %c0_22, %c0_23] : memref<1x16x384xf32, #tpu.memory_space<vmem>>, vector<1x16x384xf32>
    %30 = vector.shape_cast %29 : vector<1x16x384xf32> to vector<16x384xf32>
    %31 = vector.shape_cast %28 : vector<16x384xf32> to vector<1x16x384xf32>
    tpu.vector_store %arg7[%c0_21, %c0_22, %c0_23], %31 {strides = array<i32>} : memref<1x16x384xf32, #tpu.memory_space<vmem>>, vector<1x16x384xf32>,
    return
  }
  func.func @transform_0(%arg0: i32, %arg1: i32) -> (i32, i32, i32) {
    %c0_i32 = arith.constant 0 : i32
    %c0_i32_0 = arith.constant 0 : i32
    return %arg0, %c0_i32, %arg1 : i32, i32, i32
  }
  func.func @transform_1(%arg0: i32, %arg1: i32) -> (i32, i32, i32) {
    %c0_i32 = arith.constant 0 : i32
    %c0_i32_0 = arith.constant 0 : i32
    %c0_i32_1 = arith.constant 0 : i32
    return %arg0, %c0_i32, %c0_i32_0 : i32, i32, i32
  }
  func.func @transform_2(%arg0: i32, %arg1: i32) -> (i32, i32, i32) {
    %c0_i32 = arith.constant 0 : i32
    %c0_i32_0 = arith.constant 0 : i32
    %c0_i32_1 = arith.constant 0 : i32
    return %arg0, %c0_i32, %c0_i32_0 : i32, i32, i32
  }
  func.func @transform_3(%arg0: i32, %arg1: i32) -> (i32, i32, i32) {
    %c0_i32 = arith.constant 0 : i32
    %c0_i32_0 = arith.constant 0 : i32
    %c0_i32_1 = arith.constant 0 : i32
    return %arg0, %c0_i32, %c0_i32_0 : i32, i32, i32
  }
  func.func @transform_4(%arg0: i32, %arg1: i32) -> (i32, i32, i32) {
    %c0_i32 = arith.constant 0 : i32
    %c0_i32_0 = arith.constant 0 : i32
    %c0_i32_1 = arith.constant 0 : i32
    return %arg0, %c0_i32, %c0_i32_0 : i32, i32, i32
  }
  func.func @transform_5(%arg0: i32, %arg1: i32) -> (i32, i32, i32) {
    %c0_i32 = arith.constant 0 : i32
    %c0_i32_0 = arith.constant 0 : i32
    return %arg0, %c0_i32, %arg1 : i32, i32, i32
  }
}

</mosaic_0001>

<llo_original>
// kernel: tpu_custom_call.1
$region0: #{tpu_custom_call.1}
  #allocation0 [shape = 'u32[]', space=smem, size = 0x4, offset = 0x4, fixed_abs, tag = 'smem constant byte address 0x4 - core index']
  #allocation1 [shape = 'u32[144,128]{1,0:T(1,128)}', space=vmem, size = 0x12000, scoped, tag = 'internal scratch']
  %s0 = inlined_call_operand.hbm [shape: f32[8,16,384], index: 0, kind: input, shape index: {}]
  %s1 = inlined_call_operand.vmem [shape: f32[8,16,16], index: 1, kind: input, shape index: {}]
  %s2 = inlined_call_operand.vmem [shape: f32[8,16,1], index: 2, kind: input, shape index: {}]
  %s3 = inlined_call_operand.vmem [shape: f32[8,16,16], index: 3, kind: input, shape index: {}]
  %s4 = inlined_call_operand.vmem [shape: f32[8,16,1], index: 4, kind: input, shape index: {}]
  %s5 = inlined_call_operand.hbm [shape: f32[8,16,384], index: 5, kind: output, shape index: {}]
  %s6 = sld [smem:[#allocation0]]
  $region57: #{tpu_custom_call.1} parent=0
    _
  %s8 = ssub.s32 1, %s6
  %s9 = scalar_select 0, %s8, %s6
  $region1: #{tpu_custom_call.1} parent=0
    #allocation2 [shape = 'u8[49152]{0}', space=vmem, size = 0xc000, scoped, tag = 'input window, operand 0']
    #allocation3 [shape = 's32[2]{0}', space=sflag, size = 0x8, scoped, tag = 'scoped memory for tpu_custom_call.1']
    #allocation4 [shape = 's32[2]{0}', space=sflag, size = 0x8, scoped, tag = 'scoped memory for tpu_custom_call.1']
    #allocation5 [shape = 'u8[49152]{0}', space=vmem, size = 0xc000, scoped, tag = 'output window, operand 0']
    %10 = vsyncpa [#allocation3], 0
    %s11 = scalar_lea.sflag [#allocation3], 1
    %12 = vsyncpa %s11, 0
    %13 = vsyncpa [#allocation4], 0
    %s14 = scalar_lea.sflag [#allocation4], 1
    %15 = vsyncpa %s14, 0
    loop: start=0, step=1, limit=10
    $region2: #{tpu_custom_call.1} parent=1 // loop_pre_header
      _
    $region3: #{tpu_custom_call.1} parent=1 // loop_header
      %s17 = sphi 0, %s21
      %p18 = scmp.ge.s32.totalorder %s17, 10
      %s24 = sphi 0, %s36
      %s25 = sphi 0, %s32
      %s26 = sphi 0, %s24
      %s27 = sphi 0, %s25
      %s28 = sphi 0, %s26
      %s29 = sphi 0, %s27
      %s41 = sphi 0, %s43
      %s44 = sphi 0, %s41
      %s45 = sphi 0, %s44
      %s61 = sphi 0, %s45
      %s67 = sphi 0, %s69
      %s70 = sphi 0, %s67
      %s71 = sphi 0, %s70
      %s87 = sphi 0, %s71
      %s93 = sphi 0, %s95
      %s96 = sphi 0, %s93
      %s97 = sphi 0, %s96
      %s113 = sphi 0, %s97
      %s119 = sphi 0, %s121
      %s122 = sphi 0, %s119
      %s123 = sphi 0, %s122
      %s139 = sphi 0, %s123
      %s145 = sphi 0, %s147
      %s148 = sphi 0, %s145
      %s149 = sphi 0, %s148
      %s165 = sphi 0, %s149
      %s173 = sphi 0, %s175
      %s176 = sphi 0, %s173
      %s177 = sphi 0, %s176
      %s193 = sphi 0, %s177
    $region4: #{tpu_custom_call.1} parent=1 // loop_header_branch
      %20 = sbr.rel (%p18) target = $region8
    $region5: #{tpu_custom_call.1} parent=1 // loop_body
      %s22 = ssub.s32 %s17, 1
      %s23 = ssub.s32 %s17, 2
      %s30 = sadd.s32 1, %s25
      %p31 = scmp.ge.s32.totalorder %s30, 1
      %s32 = scalar_select %p31, 0, %s30
      %s33 = sadd.s32 1, %s24
      %s34 = scalar_select %p31, %s33, %s24
      %p35 = scmp.ge.s32.totalorder %s34, 8
      %s36 = scalar_select %p35, 0, %s34
      %s37 = ssub.s32 %s24, %s36
      %s38 = ssub.s32 %s25, %s32
      %s39 = sor.u32 %s37, %s38
      %p40 = scmp.eq.s32.totalorder %s39, 0
      %s42 = sadd.s32 %s41, 1
      %s43 = scalar_select %p40, %s41, %s42
      %p46 = pneg %p40
      %p47 = scmp.eq.s32.totalorder %s17, 7
      %p48 = por %p46, %p47
      %p49 = scmp.ne.s32.totalorder %s41, %s44
      %p50 = scmp.eq.s32.totalorder %s17, 0
      %p51 = por %p49, %p50
      %p52 = scmp.ne.s32.totalorder %s41, %s44
      %p53 = scmp.eq.s32.totalorder %s22, 7
      %p54 = por %p52, %p53
      %p55 = scmp.ne.s32.totalorder %s44, %s45
      %p56 = scmp.eq.s32.totalorder %s22, 0
      %p57 = por %p55, %p56
      %p58 = scmp.ne.s32.totalorder %s44, %s45
      %p59 = scmp.eq.s32.totalorder %s23, 7
      %p60 = por %p58, %p59
      %p62 = scmp.ne.s32.totalorder %s45, %s61
      %p63 = scmp.eq.s32.totalorder %s23, 0
      %p64 = por %p62, %p63
      %s65 = ssub.s32 %s24, %s36
      %p66 = scmp.eq.s32.totalorder %s65, 0
      %s68 = sadd.s32 %s67, 1
      %s69 = scalar_select %p66, %s67, %s68
      %p72 = pneg %p66
      %p73 = scmp.eq.s32.totalorder %s17, 7
      %p74 = por %p72, %p73
      %p75 = scmp.ne.s32.totalorder %s67, %s70
      %p76 = scmp.eq.s32.totalorder %s17, 0
      %p77 = por %p75, %p76
      %p78 = scmp.ne.s32.totalorder %s67, %s70
      %p79 = scmp.eq.s32.totalorder %s22, 7
      %p80 = por %p78, %p79
      %p81 = scmp.ne.s32.totalorder %s70, %s71
      %p82 = scmp.eq.s32.totalorder %s22, 0
      %p83 = por %p81, %p82
      %p84 = scmp.ne.s32.totalorder %s70, %s71
      %p85 = scmp.eq.s32.totalorder %s23, 7
      %p86 = por %p84, %p85
      %p88 = scmp.ne.s32.totalorder %s71, %s87
      %p89 = scmp.eq.s32.totalorder %s23, 0
      %p90 = por %p88, %p89
      %s91 = ssub.s32 %s24, %s36
      %p92 = scmp.eq.s32.totalorder %s91, 0
      %s94 = sadd.s32 %s93, 1
      %s95 = scalar_select %p92, %s93, %s94
      %p98 = pneg %p92
      %p99 = scmp.eq.s32.totalorder %s17, 7
      %p100 = por %p98, %p99
      %p101 = scmp.ne.s32.totalorder %s93, %s96
      %p102 = scmp.eq.s32.totalorder %s17, 0
      %p103 = por %p101, %p102
      %p104 = scmp.ne.s32.totalorder %s93, %s96
      %p105 = scmp.eq.s32.totalorder %s22, 7
      %p106 = por %p104, %p105
      %p107 = scmp.ne.s32.totalorder %s96, %s97
      %p108 = scmp.eq.s32.totalorder %s22, 0
      %p109 = por %p107, %p108
      %p110 = scmp.ne.s32.totalorder %s96, %s97
      %p111 = scmp.eq.s32.totalorder %s23, 7
      %p112 = por %p110, %p111
      %p114 = scmp.ne.s32.totalorder %s97, %s113
      %p115 = scmp.eq.s32.totalorder %s23, 0
      %p116 = por %p114, %p115
      %s117 = ssub.s32 %s24, %s36
      %p118 = scmp.eq.s32.totalorder %s117, 0
      %s120 = sadd.s32 %s119, 1
      %s121 = scalar_select %p118, %s119, %s120
      %p124 = pneg %p118
      %p125 = scmp.eq.s32.totalorder %s17, 7
      %p126 = por %p124, %p125
      %p127 = scmp.ne.s32.totalorder %s119, %s122
      %p128 = scmp.eq.s32.totalorder %s17, 0
      %p129 = por %p127, %p128
      %p130 = scmp.ne.s32.totalorder %s119, %s122
      %p131 = scmp.eq.s32.totalorder %s22, 7
      %p132 = por %p130, %p131
      %p133 = scmp.ne.s32.totalorder %s122, %s123
      %p134 = scmp.eq.s32.totalorder %s22, 0
      %p135 = por %p133, %p134
      %p136 = scmp.ne.s32.totalorder %s122, %s123
      %p137 = scmp.eq.s32.totalorder %s23, 7
      %p138 = por %p136, %p137
      %p140 = scmp.ne.s32.totalorder %s123, %s139
      %p141 = scmp.eq.s32.totalorder %s23, 0
      %p142 = por %p140, %p141
      %s143 = ssub.s32 %s24, %s36
      %p144 = scmp.eq.s32.totalorder %s143, 0
      %s146 = sadd.s32 %s145, 1
      %s147 = scalar_select %p144, %s145, %s146
      %p150 = pneg %p144
      %p151 = scmp.eq.s32.totalorder %s17, 7
      %p152 = por %p150, %p151
      %p153 = scmp.ne.s32.totalorder %s145, %s148
      %p154 = scmp.eq.s32.totalorder %s17, 0
      %p155 = por %p153, %p154
      %p156 = scmp.ne.s32.totalorder %s145, %s148
      %p157 = scmp.eq.s32.totalorder %s22, 7
      %p158 = por %p156, %p157
      %p159 = scmp.ne.s32.totalorder %s148, %s149
      %p160 = scmp.eq.s32.totalorder %s22, 0
      %p161 = por %p159, %p160
      %p162 = scmp.ne.s32.totalorder %s148, %s149
      %p163 = scmp.eq.s32.totalorder %s23, 7
      %p164 = por %p162, %p163
      %p166 = scmp.ne.s32.totalorder %s149, %s165
      %p167 = scmp.eq.s32.totalorder %s23, 0
      %p168 = por %p166, %p167
      %s169 = ssub.s32 %s24, %s36
      %s170 = ssub.s32 %s25, %s32
      %s171 = sor.u32 %s169, %s170
      %p172 = scmp.eq.s32.totalorder %s171, 0
      %s174 = sadd.s32 %s173, 1
      %s175 = scalar_select %p172, %s173, %s174
      %p178 = pneg %p172
      %p179 = scmp.eq.s32.totalorder %s17, 7
      %p180 = por %p178, %p179
      %p181 = scmp.ne.s32.totalorder %s173, %s176
      %p182 = scmp.eq.s32.totalorder %s17, 0
      %p183 = por %p181, %p182
      %p184 = scmp.ne.s32.totalorder %s173, %s176
      %p185 = scmp.eq.s32.totalorder %s22, 7
      %p186 = por %p184, %p185
      %p187 = scmp.ne.s32.totalorder %s176, %s177
      %p188 = scmp.eq.s32.totalorder %s22, 0
      %p189 = por %p187, %p188
      %p190 = scmp.ne.s32.totalorder %s176, %s177
      %p191 = scmp.eq.s32.totalorder %s23, 7
      %p192 = por %p190, %p191
      %p194 = scmp.ne.s32.totalorder %s177, %s193
      %p195 = scmp.eq.s32.totalorder %s23, 0
      %p196 = por %p194, %p195
      %p197 = scmp.le.s32.totalorder 1, %s17
      %p198 = scmp.lt.s32.totalorder %s17, 9
      %p199 = pnand %p197, %p198
      %p200 = pneg %p199
      // Predicated region
      $region9: #{tpu_custom_call.1} parent=5 // pred_check
        _
      $region10: #{tpu_custom_call.1} parent=5 // pred_check_branch
        %202 = sbr.rel (%p199) target = $region12
      $region11: #{tpu_custom_call.1} parent=5 // pred_region
        %s203 = ssub.s32 %s17, 1
      $region12: #{tpu_custom_call.1} parent=5 // pred_fallthru
        _
      %p204 = scmp.lt.s32.totalorder %s17, 8
      // Predicated region
      $region13: #{tpu_custom_call.1} parent=5 // pred_check
        %p205 = pneg %p204
      $region14: #{tpu_custom_call.1} parent=5 // pred_check_branch
        %207 = sbr.rel (%p205) target = $region16
      $region15: #{tpu_custom_call.1} parent=5 // pred_region
        // Predicated region
        $region17: #{tpu_custom_call.1} parent=15 // pred_check
          %p208 = pneg %p51
        $region18: #{tpu_custom_call.1} parent=15 // pred_check_branch
          %210 = sbr.rel (%p208) target = $region20
        $region19: #{tpu_custom_call.1} parent=15 // pred_region
          %s211 = sand.u32 %s41, 1
          %s212 = scalar_lea.sflag [#allocation3], %s211
          %s213 = sand.u32 %s41, 1
          %s214 = smul.addr %s213, 48
          %s215 = scalar_lea.vmem [#allocation2], %s214
          %s216 = smul.u32 3, %s25
          %s218 = ssub.s32 768, 768
          %219 = vsyncadd %s212, %s218
          %s220 = smul.addr %s24, 6
          %s221 = sadd.s32 %s216, %s220
          %s222 = smul.addr %s221, 128
          %s223 = scalar_lea.hbm %s0, %s222
          %s224 = sshll.u32 %s215, 4
          %s225 = int_to_ptr.vmem [resolvable:$true] %s224
          %230 = dma.hbm_to_vmem [thread:$0]  %s223, 768, %s225, %s212, 384, 384, 24
        $region20: #{tpu_custom_call.1} parent=15 // pred_fallthru
          _
        // Predicated region
        $region21: #{tpu_custom_call.1} parent=15 // pred_check
          %p231 = pneg %p77
        $region22: #{tpu_custom_call.1} parent=15 // pred_check_branch
          %233 = sbr.rel (%p231) target = $region24
        $region23: #{tpu_custom_call.1} parent=15 // pred_region
          %p234 = scmp.lt.s32.totalorder %s24, 7
          %s235 = scalar_select %p234, %s24, 7
          %s236 = smul.addr %s235, 2
          %s237 = smul.addr %s236, 8
          %s238 = scalar_lea.vmem %s1, %s237
        $region24: #{tpu_custom_call.1} parent=15 // pred_fallthru
          _
        // Predicated region
        $region25: #{tpu_custom_call.1} parent=15 // pred_check
          %p239 = pneg %p103
        $region26: #{tpu_custom_call.1} parent=15 // pred_check_branch
          %241 = sbr.rel (%p239) target = $region28
        $region27: #{tpu_custom_call.1} parent=15 // pred_region
          %p242 = scmp.lt.s32.totalorder %s24, 7
          %s243 = scalar_select %p242, %s24, 7
          %s244 = smul.addr %s243, 2
          %s245 = smul.addr %s244, 8
          %s246 = scalar_lea.vmem %s2, %s245
        $region28: #{tpu_custom_call.1} parent=15 // pred_fallthru
          _
        // Predicated region
        $region29: #{tpu_custom_call.1} parent=15 // pred_check
          %p247 = pneg %p129
        $region30: #{tpu_custom_call.1} parent=15 // pred_check_branch
          %249 = sbr.rel (%p247) target = $region32
        $region31: #{tpu_custom_call.1} parent=15 // pred_region
          %p250 = scmp.lt.s32.totalorder %s24, 7
          %s251 = scalar_select %p250, %s24, 7
          %s252 = smul.addr %s251, 2
          %s253 = smul.addr %s252, 8
          %s254 = scalar_lea.vmem %s3, %s253
        $region32: #{tpu_custom_call.1} parent=15 // pred_fallthru
          _
        // Predicated region
        $region33: #{tpu_custom_call.1} parent=15 // pred_check
          %p255 = pneg %p155
        $region34: #{tpu_custom_call.1} parent=15 // pred_check_branch
          %257 = sbr.rel (%p255) target = $region36
        $region35: #{tpu_custom_call.1} parent=15 // pred_region
          %p258 = scmp.lt.s32.totalorder %s24, 7
          %s259 = scalar_select %p258, %s24, 7
          %s260 = smul.addr %s259, 2
          %s261 = smul.addr %s260, 8
          %s262 = scalar_lea.vmem %s4, %s261
        $region36: #{tpu_custom_call.1} parent=15 // pred_fallthru
          _
      $region16: #{tpu_custom_call.1} parent=5 // pred_fallthru
        _
      %p263 = scmp.le.s32.totalorder 1, %s17
      %p264 = scmp.lt.s32.totalorder %s17, 9
      %p265 = pnand %p263, %p264
      %p266 = pneg %p265
      // Predicated region
      $region37: #{tpu_custom_call.1} parent=5 // pred_check
        _
      $region38: #{tpu_custom_call.1} parent=5 // pred_check_branch
        %268 = sbr.rel (%p265) target = $region40
      $region39: #{tpu_custom_call.1} parent=5 // pred_region
        %s269 = ssub.s32 %s17, 1
        %s270 = sand.u32 %s44, 1
        %s271 = scalar_lea.sflag [#allocation3], %s270
        %s272 = sand.u32 %s44, 1
        %s273 = smul.addr %s272, 48
        %s274 = scalar_lea.vmem [#allocation2], %s273
        // Predicated region
        $region41: #{tpu_custom_call.1} parent=39 // pred_check
          %p275 = pneg %p57
        $region42: #{tpu_custom_call.1} parent=39 // pred_check_branch
          %277 = sbr.rel (%p275) target = $region44
        $region43: #{tpu_custom_call.1} parent=39 // pred_region
          %278 = dma.done %s271, 768
        $region44: #{tpu_custom_call.1} parent=39 // pred_fallthru
          _
        %s279 = sand.u32 %s44, 1
        %s280 = scalar_lea.sflag [#allocation3], %s279
        %s281 = sand.u32 %s44, 1
        %s282 = smul.addr %s281, 48
        %s283 = scalar_lea.vmem [#allocation2], %s282
        %p284 = pneg %p57
        %p285 = pneg %p54
        %p286 = scmp.lt.s32.totalorder %s26, 7
        %s287 = scalar_select %p286, %s26, 7
        %s288 = smul.addr %s287, 2
        %s289 = smul.addr %s288, 8
        %s290 = scalar_lea.vmem %s1, %s289
        %p291 = pneg %p83
        %p292 = pneg %p80
        %p293 = scmp.lt.s32.totalorder %s26, 7
        %s294 = scalar_select %p293, %s26, 7
        %s295 = smul.addr %s294, 2
        %s296 = smul.addr %s295, 8
        %s297 = scalar_lea.vmem %s2, %s296
        %p298 = pneg %p109
        %p299 = pneg %p106
        %p300 = scmp.lt.s32.totalorder %s26, 7
        %s301 = scalar_select %p300, %s26, 7
        %s302 = smul.addr %s301, 2
        %s303 = smul.addr %s302, 8
        %s304 = scalar_lea.vmem %s3, %s303
        %p305 = pneg %p135
        %p306 = pneg %p132
        %p307 = scmp.lt.s32.totalorder %s26, 7
        %s308 = scalar_select %p307, %s26, 7
        %s309 = smul.addr %s308, 2
        %s310 = smul.addr %s309, 8
        %s311 = scalar_lea.vmem %s4, %s310
        %p312 = pneg %p161
        %p313 = pneg %p158
        %p314 = pneg %p189
        %p315 = pneg %p186
        %s316 = sand.u32 %s176, 1
        %s317 = scalar_lea.sflag [#allocation4], %s316
        %s318 = sand.u32 %s176, 1
        %s319 = smul.addr %s318, 48
        %s320 = scalar_lea.vmem [#allocation5], %s319
        %s321 = smul.u32 3, %s27
        %p322 = scmp.lt.s32.totalorder %s26, 7
        %s323 = scalar_select %p322, %s26, 7
        %s324 = smul.addr %s323, 2
        %s325 = smul.addr %s324, 8
        %s326 = scalar_lea.vmem %s1, %s325
        %p327 = scmp.lt.s32.totalorder %s26, 7
        %s328 = scalar_select %p327, %s26, 7
        %s329 = smul.addr %s328, 2
        %s330 = smul.addr %s329, 8
        %s331 = scalar_lea.vmem %s2, %s330
        %p332 = scmp.lt.s32.totalorder %s26, 7
        %s333 = scalar_select %p332, %s26, 7
        %s334 = smul.addr %s333, 2
        %s335 = smul.addr %s334, 8
        %s336 = scalar_lea.vmem %s3, %s335
        %p337 = scmp.lt.s32.totalorder %s26, 7
        %s338 = scalar_select %p337, %s26, 7
        %s339 = smul.addr %s338, 2
        %s340 = smul.addr %s339, 8
        %s341 = scalar_lea.vmem %s4, %s340
        %s342 = smul.u32 3, %s27
        %v343 = vld [vmem:[%s274] sm:$0xff]
        %v344 = vld [vmem:[%s274 + $0x8] sm:$0xff]
        %v345 = vld [vmem:[%s274 + $0x10] sm:$0xff]
        %v346 = vld [vmem:[%s274 + $0x18] sm:$0xff]
        %v347 = vld [vmem:[%s274 + $0x20] sm:$0xff]
        %v348 = vld [vmem:[%s274 + $0x28] sm:$0xff]
        %v349 = vld [vmem:[%s326] sm:$0xff]
        %v350 = vld [vmem:[%s326 + $0x8] sm:$0xff]
        %v351 = vld [vmem:[%s336] sm:$0xff]
        %v352 = vld [vmem:[%s336 + $0x8] sm:$0xff]
        %v353 = vld [vmem:[%s331] sm:$0xff]
        %v354 = vld [vmem:[%s331 + $0x8] sm:$0xff]
        %v355 = vld [vmem:[%s341] sm:$0xff]
        %v356 = vld [vmem:[%s341 + $0x8] sm:$0xff]
        %358 = vset.pattern.permute.xlu0 0
        %359 = vperm.xlu0 %358, %v353
        %v360 = vpop.permute.xlu0 %359
        %363 = vset.pattern.permute.xlu0 0
        %364 = vperm.xlu0 %363, %v354
        %v365 = vpop.permute.xlu0 %364
        %vm367 = vcmask 130048
        %v369 = vsel %vm367, %v349, 0
        %v372 = vsel %vm367, %v350, 0
        %374 = vmatprep.subr.mxu0 0.0
        %375 = vmatpush1.msra.mxu0 0.0
        %376 = vmatprep.subr.mxu0 0.0
        %377 = vmatpush1.msra.mxu0 0.0
        %378 = vmatprep.subr.mxu0 0.0
        %379 = vmatpush1.msra.mxu0 0.0
        %380 = vmatprep.subr.mxu0 0.0
        %381 = vmatpush1.msra.mxu0 0.0
        %382 = vmatprep.subr.mxu0 0.0
        %383 = vmatpush1.msra.mxu0 0.0
        %384 = vmatprep.subr.mxu0 0.0
        %385 = vmatpush1.msra.mxu0 0.0
        %386 = vmatprep.subr.mxu0 0.0
        %387 = vmatpush1.msra.mxu0 0.0
        %388 = vmatprep.subr.mxu0 0.0
        %389 = vmatpush1.msra.mxu0 0.0
        %390 = vmatprep.subr.mxu0 0.0
        %391 = vmatpush1.msra.mxu0 0.0
        %392 = vmatprep.subr.mxu0 0.0
        %393 = vmatpush1.msra.mxu0 0.0
        %394 = vmatprep.subr.mxu0 0.0
        %395 = vmatpush1.msra.mxu0 0.0
        %396 = vmatprep.subr.mxu0 0.0
        %397 = vmatpush1.msra.mxu0 0.0
        %398 = vmatprep.subr.mxu0 0.0
        %399 = vmatpush1.msra.mxu0 0.0
        %400 = vmatprep.subr.mxu0 0.0
        %401 = vmatpush1.msra.mxu0 0.0
        %402 = vmatprep.subr.mxu0 %v347
        %403 = vmatpush1.msra.mxu0 %v346
        %404 = vmatprep.subr.mxu0 %v344
        %405 = vmatpush1.msra.mxu0 %v343
        %406 = vmatprep.subr.mxu0 0.0
        %407 = vmatpush2.msra.mxu0 0.0
        %408 = vmatprep.subr.mxu0 0.0
        %409 = vmatpush2.msra.mxu0 0.0
        %410 = vmatprep.subr.mxu0 0.0
        %411 = vmatpush2.msra.mxu0 0.0
        %412 = vmatprep.subr.mxu0 0.0
        %413 = vmatpush2.msra.mxu0 0.0
        %414 = vmatprep.subr.mxu0 0.0
        %415 = vmatpush2.msra.mxu0 0.0
        %416 = vmatprep.subr.mxu0 0.0
        %417 = vmatpush2.msra.mxu0 0.0
        %418 = vmatprep.subr.mxu0 0.0
        %419 = vmatpush2.msra.mxu0 0.0
        %420 = vmatprep.subr.mxu0 0.0
        %421 = vmatpush2.msra.mxu0 0.0
        %422 = vmatprep.subr.mxu0 0.0
        %423 = vmatpush2.msra.mxu0 0.0
        %424 = vmatprep.subr.mxu0 0.0
        %425 = vmatpush2.msra.mxu0 0.0
        %426 = vmatprep.subr.mxu0 0.0
        %427 = vmatpush2.msra.mxu0 0.0
        %428 = vmatprep.subr.mxu0 0.0
        %429 = vmatpush2.msra.mxu0 0.0
        %430 = vmatprep.subr.mxu0 0.0
        %431 = vmatpush2.msra.mxu0 0.0
        %432 = vmatprep.subr.mxu0 0.0
        %433 = vmatpush2.msra.mxu0 0.0
        %434 = vmatprep.subr.mxu0 0.0
        %435 = vmatpush2.msra.mxu0 0.0
        %436 = vmatprep.subr.mxu0 0.0
        %437 = vmatpush2.msra.mxu0 0.0
        %438 = vmatprep.mubr.f32.mxu0 0.0
        %439 = vmatmul.mubr.f32.gmra.mxu0 %v369
        %v440 = vpop.f32.mrf.mxu0
        %v441 = vadd.f32 %v360, %v440
        %v442 = vpop.f32.mrf.mxu0
        %v443 = vadd.f32 %v360, %v442
        %444 = vmatprep.mubr.f32.mxu0 0.0
        %445 = vmatmul.mubr.f32.gmra.mxu0 %v372
        %v446 = vpop.f32.mrf.mxu0
        %v447 = vadd.f32 %v365, %v446
        %v448 = vpop.f32.mrf.mxu0
        %v449 = vadd.f32 %v365, %v448
        %450 = vdwg.mxu0
        %451 = vmatprep.subr.mxu0 0.0
        %452 = vmatpush1.msra.mxu0 0.0
        %453 = vmatprep.subr.mxu0 0.0
        %454 = vmatpush1.msra.mxu0 0.0
        %455 = vmatprep.subr.mxu0 0.0
        %456 = vmatpush1.msra.mxu0 0.0
        %457 = vmatprep.subr.mxu0 0.0
        %458 = vmatpush1.msra.mxu0 0.0
        %459 = vmatprep.subr.mxu0 0.0
        %460 = vmatpush1.msra.mxu0 0.0
        %461 = vmatprep.subr.mxu0 0.0
        %462 = vmatpush1.msra.mxu0 0.0
        %463 = vmatprep.subr.mxu0 0.0
        %464 = vmatpush1.msra.mxu0 0.0
        %465 = vmatprep.subr.mxu0 0.0
        %466 = vmatpush1.msra.mxu0 0.0
        %467 = vmatprep.subr.mxu0 0.0
        %468 = vmatpush1.msra.mxu0 0.0
        %469 = vmatprep.subr.mxu0 0.0
        %470 = vmatpush1.msra.mxu0 0.0
        %471 = vmatprep.subr.mxu0 0.0
        %472 = vmatpush1.msra.mxu0 0.0
        %473 = vmatprep.subr.mxu0 0.0
        %474 = vmatpush1.msra.mxu0 0.0
        %475 = vmatprep.subr.mxu0 0.0
        %476 = vmatpush1.msra.mxu0 0.0
        %477 = vmatprep.subr.mxu0 0.0
        %478 = vmatpush1.msra.mxu0 0.0
        %479 = vmatprep.subr.mxu0 0.0
        %480 = vmatpush1.msra.mxu0 %v348
        %481 = vmatprep.subr.mxu0 0.0
        %482 = vmatpush1.msra.mxu0 %v345
        %483 = vmatprep.subr.mxu0 0.0
        %484 = vmatpush2.msra.mxu0 0.0
        %485 = vmatprep.subr.mxu0 0.0
        %486 = vmatpush2.msra.mxu0 0.0
        %487 = vmatprep.subr.mxu0 0.0
        %488 = vmatpush2.msra.mxu0 0.0
        %489 = vmatprep.subr.mxu0 0.0
        %490 = vmatpush2.msra.mxu0 0.0
        %491 = vmatprep.subr.mxu0 0.0
        %492 = vmatpush2.msra.mxu0 0.0
        %493 = vmatprep.subr.mxu0 0.0
        %494 = vmatpush2.msra.mxu0 0.0
        %495 = vmatprep.subr.mxu0 0.0
        %496 = vmatpush2.msra.mxu0 0.0
        %497 = vmatprep.subr.mxu0 0.0
        %498 = vmatpush2.msra.mxu0 0.0
        %499 = vmatprep.subr.mxu0 0.0
        %500 = vmatpush2.msra.mxu0 0.0
        %501 = vmatprep.subr.mxu0 0.0
        %502 = vmatpush2.msra.mxu0 0.0
        %503 = vmatprep.subr.mxu0 0.0
        %504 = vmatpush2.msra.mxu0 0.0
        %505 = vmatprep.subr.mxu0 0.0
        %506 = vmatpush2.msra.mxu0 0.0
        %507 = vmatprep.subr.mxu0 0.0
        %508 = vmatpush2.msra.mxu0 0.0
        %509 = vmatprep.subr.mxu0 0.0
        %510 = vmatpush2.msra.mxu0 0.0
        %511 = vmatprep.subr.mxu0 0.0
        %512 = vmatpush2.msra.mxu0 0.0
        %513 = vmatprep.subr.mxu0 0.0
        %514 = vmatpush2.msra.mxu0 0.0
        %515 = vmatprep.mubr.f32.mxu0 0.0
        %516 = vmatmul.mubr.f32.gmra.mxu0 %v369
        %v517 = vpop.f32.mrf.mxu0
        %v518 = vadd.f32 %v360, %v517
        %v519 = vpop.f32.mrf.mxu0
        %520 = vmatprep.mubr.f32.mxu0 0.0
        %521 = vmatmul.mubr.f32.gmra.mxu0 %v372
        %v522 = vpop.f32.mrf.mxu0
        %v523 = vadd.f32 %v365, %v522
        %v524 = vpop.f32.mrf.mxu0
        %525 = vdwg.mxu0
        %v526 = vmax.f32 %v441, 0.0
        %v527 = vmax.f32 %v443, 0.0
        %v528 = vmax.f32 %v518, 0.0
        %v529 = vmax.f32 %v447, 0.0
        %v530 = vmax.f32 %v449, 0.0
        %v531 = vmax.f32 %v523, 0.0
        %533 = vset.pattern.permute.xlu0 0
        %534 = vperm.xlu0 %533, %v355
        %v535 = vpop.permute.xlu0 %534
        %538 = vset.pattern.permute.xlu0 0
        %539 = vperm.xlu0 %538, %v356
        %v540 = vpop.permute.xlu0 %539
        %v543 = vsel %vm367, %v351, 0
        %v546 = vsel %vm367, %v352, 0
        %548 = vmatprep.subr.mxu0 0.0
        %549 = vmatpush1.msra.mxu0 0.0
        %550 = vmatprep.subr.mxu0 0.0
        %551 = vmatpush1.msra.mxu0 0.0
        %552 = vmatprep.subr.mxu0 0.0
        %553 = vmatpush1.msra.mxu0 0.0
        %554 = vmatprep.subr.mxu0 0.0
        %555 = vmatpush1.msra.mxu0 0.0
        %556 = vmatprep.subr.mxu0 0.0
        %557 = vmatpush1.msra.mxu0 0.0
        %558 = vmatprep.subr.mxu0 0.0
        %559 = vmatpush1.msra.mxu0 0.0
        %560 = vmatprep.subr.mxu0 0.0
        %561 = vmatpush1.msra.mxu0 0.0
        %562 = vmatprep.subr.mxu0 0.0
        %563 = vmatpush1.msra.mxu0 0.0
        %564 = vmatprep.subr.mxu0 0.0
        %565 = vmatpush1.msra.mxu0 0.0
        %566 = vmatprep.subr.mxu0 0.0
        %567 = vmatpush1.msra.mxu0 0.0
        %568 = vmatprep.subr.mxu0 0.0
        %569 = vmatpush1.msra.mxu0 0.0
        %570 = vmatprep.subr.mxu0 0.0
        %571 = vmatpush1.msra.mxu0 0.0
        %572 = vmatprep.subr.mxu0 0.0
        %573 = vmatpush1.msra.mxu0 0.0
        %574 = vmatprep.subr.mxu0 0.0
        %575 = vmatpush1.msra.mxu0 0.0
        %576 = vmatprep.subr.mxu0 %v530
        %577 = vmatpush1.msra.mxu0 %v529
        %578 = vmatprep.subr.mxu0 %v527
        %579 = vmatpush1.msra.mxu0 %v526
        %580 = vmatprep.subr.mxu0 0.0
        %581 = vmatpush2.msra.mxu0 0.0
        %582 = vmatprep.subr.mxu0 0.0
        %583 = vmatpush2.msra.mxu0 0.0
        %584 = vmatprep.subr.mxu0 0.0
        %585 = vmatpush2.msra.mxu0 0.0
        %586 = vmatprep.subr.mxu0 0.0
        %587 = vmatpush2.msra.mxu0 0.0
        %588 = vmatprep.subr.mxu0 0.0
        %589 = vmatpush2.msra.mxu0 0.0
        %590 = vmatprep.subr.mxu0 0.0
        %591 = vmatpush2.msra.mxu0 0.0
        %592 = vmatprep.subr.mxu0 0.0
        %593 = vmatpush2.msra.mxu0 0.0
        %594 = vmatprep.subr.mxu0 0.0
        %595 = vmatpush2.msra.mxu0 0.0
        %596 = vmatprep.subr.mxu0 0.0
        %597 = vmatpush2.msra.mxu0 0.0
        %598 = vmatprep.subr.mxu0 0.0
        %599 = vmatpush2.msra.mxu0 0.0
        %600 = vmatprep.subr.mxu0 0.0
        %601 = vmatpush2.msra.mxu0 0.0
        %602 = vmatprep.subr.mxu0 0.0
        %603 = vmatpush2.msra.mxu0 0.0
        %604 = vmatprep.subr.mxu0 0.0
        %605 = vmatpush2.msra.mxu0 0.0
        %606 = vmatprep.subr.mxu0 0.0
        %607 = vmatpush2.msra.mxu0 0.0
        %608 = vmatprep.subr.mxu0 0.0
        %609 = vmatpush2.msra.mxu0 0.0
        %610 = vmatprep.subr.mxu0 0.0
        %611 = vmatpush2.msra.mxu0 0.0
        %612 = vmatprep.mubr.f32.mxu0 0.0
        %613 = vmatmul.mubr.f32.gmra.mxu0 %v543
        %v614 = vpop.f32.mrf.mxu0
        %v615 = vadd.f32 %v535, %v614
        %v616 = vpop.f32.mrf.mxu0
        %v617 = vadd.f32 %v535, %v616
        %618 = vmatprep.mubr.f32.mxu0 0.0
        %619 = vmatmul.mubr.f32.gmra.mxu0 %v546
        %v620 = vpop.f32.mrf.mxu0
        %v621 = vadd.f32 %v540, %v620
        %v622 = vpop.f32.mrf.mxu0
        %v623 = vadd.f32 %v540, %v622
        %624 = vdwg.mxu0
        %625 = vmatprep.subr.mxu0 0.0
        %626 = vmatpush1.msra.mxu0 0.0
        %627 = vmatprep.subr.mxu0 0.0
        %628 = vmatpush1.msra.mxu0 0.0
        %629 = vmatprep.subr.mxu0 0.0
        %630 = vmatpush1.msra.mxu0 0.0
        %631 = vmatprep.subr.mxu0 0.0
        %632 = vmatpush1.msra.mxu0 0.0
        %633 = vmatprep.subr.mxu0 0.0
        %634 = vmatpush1.msra.mxu0 0.0
        %635 = vmatprep.subr.mxu0 0.0
        %636 = vmatpush1.msra.mxu0 0.0
        %637 = vmatprep.subr.mxu0 0.0
        %638 = vmatpush1.msra.mxu0 0.0
        %639 = vmatprep.subr.mxu0 0.0
        %640 = vmatpush1.msra.mxu0 0.0
        %641 = vmatprep.subr.mxu0 0.0
        %642 = vmatpush1.msra.mxu0 0.0
        %643 = vmatprep.subr.mxu0 0.0
        %644 = vmatpush1.msra.mxu0 0.0
        %645 = vmatprep.subr.mxu0 0.0
        %646 = vmatpush1.msra.mxu0 0.0
        %647 = vmatprep.subr.mxu0 0.0
        %648 = vmatpush1.msra.mxu0 0.0
        %649 = vmatprep.subr.mxu0 0.0
        %650 = vmatpush1.msra.mxu0 0.0
        %651 = vmatprep.subr.mxu0 0.0
        %652 = vmatpush1.msra.mxu0 0.0
        %653 = vmatprep.subr.mxu0 0.0
        %654 = vmatpush1.msra.mxu0 %v531
        %655 = vmatprep.subr.mxu0 0.0
        %656 = vmatpush1.msra.mxu0 %v528
        %657 = vmatprep.subr.mxu0 0.0
        %658 = vmatpush2.msra.mxu0 0.0
        %659 = vmatprep.subr.mxu0 0.0
        %660 = vmatpush2.msra.mxu0 0.0
        %661 = vmatprep.subr.mxu0 0.0
        %662 = vmatpush2.msra.mxu0 0.0
        %663 = vmatprep.subr.mxu0 0.0
        %664 = vmatpush2.msra.mxu0 0.0
        %665 = vmatprep.subr.mxu0 0.0
        %666 = vmatpush2.msra.mxu0 0.0
        %667 = vmatprep.subr.mxu0 0.0
        %668 = vmatpush2.msra.mxu0 0.0
        %669 = vmatprep.subr.mxu0 0.0
        %670 = vmatpush2.msra.mxu0 0.0
        %671 = vmatprep.subr.mxu0 0.0
        %672 = vmatpush2.msra.mxu0 0.0
        %673 = vmatprep.subr.mxu0 0.0
        %674 = vmatpush2.msra.mxu0 0.0
        %675 = vmatprep.subr.mxu0 0.0
        %676 = vmatpush2.msra.mxu0 0.0
        %677 = vmatprep.subr.mxu0 0.0
        %678 = vmatpush2.msra.mxu0 0.0
        %679 = vmatprep.subr.mxu0 0.0
        %680 = vmatpush2.msra.mxu0 0.0
        %681 = vmatprep.subr.mxu0 0.0
        %682 = vmatpush2.msra.mxu0 0.0
        %683 = vmatprep.subr.mxu0 0.0
        %684 = vmatpush2.msra.mxu0 0.0
        %685 = vmatprep.subr.mxu0 0.0
        %686 = vmatpush2.msra.mxu0 0.0
        %687 = vmatprep.subr.mxu0 0.0
        %688 = vmatpush2.msra.mxu0 0.0
        %689 = vmatprep.mubr.f32.mxu0 0.0
        %690 = vmatmul.mubr.f32.gmra.mxu0 %v543
        %v691 = vpop.f32.mrf.mxu0
        %v692 = vadd.f32 %v535, %v691
        %v693 = vpop.f32.mrf.mxu0
        %694 = vmatprep.mubr.f32.mxu0 0.0
        %695 = vmatmul.mubr.f32.gmra.mxu0 %v546
        %v696 = vpop.f32.mrf.mxu0
        %v697 = vadd.f32 %v540, %v696
        %v698 = vpop.f32.mrf.mxu0
        %699 = vdwg.mxu0
        %vm700 = vcmp.gt.f32.partialorder %v615, 0.01
        %vm701 = vcmp.gt.f32.partialorder %v617, 0.01
        %vm702 = vcmp.gt.f32.partialorder %v692, 0.01
        %vm703 = vcmp.gt.f32.partialorder %v621, 0.01
        %vm704 = vcmp.gt.f32.partialorder %v623, 0.01
        %vm705 = vcmp.gt.f32.partialorder %v697, 0.01
        %v706 = vsub.f32 %v615, 0.01
        %v707 = vsub.f32 %v617, 0.01
        %v708 = vsub.f32 %v692, 0.01
        %v709 = vsub.f32 %v621, 0.01
        %v710 = vsub.f32 %v623, 0.01
        %v711 = vsub.f32 %v697, 0.01
        %vm712 = vcmp.lt.f32.partialorder %v615, -0.01
        %vm713 = vcmp.lt.f32.partialorder %v617, -0.01
        %vm714 = vcmp.lt.f32.partialorder %v692, -0.01
        %vm715 = vcmp.lt.f32.partialorder %v621, -0.01
        %vm716 = vcmp.lt.f32.partialorder %v623, -0.01
        %vm717 = vcmp.lt.f32.partialorder %v697, -0.01
        %v718 = vadd.f32 %v615, 0.01
        %v719 = vadd.f32 %v617, 0.01
        %v720 = vadd.f32 %v692, 0.01
        %v721 = vadd.f32 %v621, 0.01
        %v722 = vadd.f32 %v623, 0.01
        %v723 = vadd.f32 %v697, 0.01
        %v724 = vsel %vm712, %v718, 0.0
        %v725 = vsel %vm713, %v719, 0.0
        %v726 = vsel %vm714, %v720, 0.0
        %v727 = vsel %vm715, %v721, 0.0
        %v728 = vsel %vm716, %v722, 0.0
        %v729 = vsel %vm717, %v723, 0.0
        %v730 = vsel %vm700, %v706, %v724
        %v731 = vsel %vm701, %v707, %v725
        %v732 = vsel %vm702, %v708, %v726
        %v733 = vsel %vm703, %v709, %v727
        %v734 = vsel %vm704, %v710, %v728
        %v735 = vsel %vm705, %v711, %v729
        %736 = vst [vmem:[%s320] sm:$0xff] %v730
        %737 = vst [vmem:[%s320 + $0x8] sm:$0xff] %v731
        %738 = vst [vmem:[%s320 + $0x10] sm:$0xff] %v732
        %739 = vst [vmem:[%s320 + $0x18] sm:$0xff] %v733
        %740 = vst [vmem:[%s320 + $0x20] sm:$0xff] %v734
        %741 = vst [vmem:[%s320 + $0x28] sm:$0xff] %v735
        %s742 = sand.u32 %s176, 1
        %s743 = scalar_lea.sflag [#allocation4], %s742
        %s744 = sand.u32 %s176, 1
        %s745 = smul.addr %s744, 48
        %s746 = scalar_lea.vmem [#allocation5], %s745
        // Predicated region
        $region45: #{tpu_custom_call.1} parent=39 // pred_check
          %p747 = pneg %p186
        $region46: #{tpu_custom_call.1} parent=39 // pred_check_branch
          %749 = sbr.rel (%p747) target = $region48
        $region47: #{tpu_custom_call.1} parent=39 // pred_region
          %s750 = smul.u32 3, %s27
          %s752 = ssub.s32 768, 768
          %753 = vsyncadd %s743, %s752
          %s754 = smul.addr %s26, 6
          %s755 = sadd.s32 %s750, %s754
          %s756 = smul.addr %s755, 128
          %s757 = scalar_lea.hbm %s5, %s756
          %s758 = sshll.u32 %s746, 4
          %s759 = int_to_ptr.vmem [resolvable:$true] %s758
          %764 = dma.vmem_to_hbm [thread:$0]  %s759, 768, %s757, %s743, 384, 384, 24
        $region48: #{tpu_custom_call.1} parent=39 // pred_fallthru
          _
      $region40: #{tpu_custom_call.1} parent=5 // pred_fallthru
        _
      %p765 = scmp.le.s32.totalorder 2, %s17
      // Predicated region
      $region49: #{tpu_custom_call.1} parent=5 // pred_check
        %p766 = pneg %p765
      $region50: #{tpu_custom_call.1} parent=5 // pred_check_branch
        %768 = sbr.rel (%p766) target = $region52
      $region51: #{tpu_custom_call.1} parent=5 // pred_region
        %s769 = ssub.s32 %s17, 2
        // Predicated region
        $region53: #{tpu_custom_call.1} parent=51 // pred_check
          %p770 = pneg %p192
        $region54: #{tpu_custom_call.1} parent=51 // pred_check_branch
          %772 = sbr.rel (%p770) target = $region56
        $region55: #{tpu_custom_call.1} parent=51 // pred_region
          %s773 = sand.u32 %s177, 1
          %s774 = scalar_lea.sflag [#allocation4], %s773
          %s775 = sand.u32 %s177, 1
          %s776 = smul.addr %s775, 48
          %s777 = scalar_lea.vmem [#allocation5], %s776
          %778 = dma.done %s774, 768
        $region56: #{tpu_custom_call.1} parent=51 // pred_fallthru
          _
      $region52: #{tpu_custom_call.1} parent=5 // pred_fallthru
        _
    $region6: #{tpu_custom_call.1} parent=1 // loop_footer
      %s21 = sadd.s32 1, %s17
    $region7: #{tpu_custom_call.1} parent=1 // loop_footer_branch
      %16 = sbr.rel target = $region3
    $region8: #{tpu_custom_call.1} parent=1 // loop_exit
      _
    %779 = vsyncpa [#allocation3], 1
    %s780 = scalar_lea.sflag [#allocation3], 1
    %781 = vsyncpa %s780, 1
    %782 = vsyncpa [#allocation4], 1
    %s783 = scalar_lea.sflag [#allocation4], 1
    %784 = vsyncpa %s783, 1

</llo_original>
